<compile_context>
chip_gen: v5e
topology: v5e:2x2
jax: 0.10.0
libtpu: 0.0.40
codegen_flags: <defaults>
</compile_context>

<pallas_src>
import math
import functools

import jax
import jax.numpy as jnp
from jax import lax
from jax.experimental import pallas as pl
from jax.experimental.pallas import tpu as pltpu


def _cross_attn_kernel(xq_ref, xkv_ref, wq_ref, bq_ref, wkv_ref, bkv_ref,
                       wp_ref, bp_ref, out_ref, kv_buf, y_buf,
                       *, n_head, head_dim):
    """One grid step = one (batch, T_q-tile); all heads handled in-kernel.

    K/V are projected once per batch element (qi == 0) with one full-width
    matmul and cached in `kv_buf` for all subsequent T_q tiles of that batch.
    """
    H, D = n_head, head_dim
    C = H * D
    scale = 1.0 / math.sqrt(D)
    cdt = xq_ref.dtype        # MXU compute dtype (bf16 in -> bf16 MXU, f32 acc)

    # ---- K/V projection: one (T_kv, C) x (C, 2C) matmul, cached in VMEM. ----
    @pl.when(pl.program_id(1) == 0)
    def _():
        kv = jnp.dot(xkv_ref[0], wkv_ref[...],
                     preferred_element_type=jnp.float32) + bkv_ref[...]
        kv_buf[...] = kv.astype(cdt)

    # ---- Q projection, full width; 1/sqrt(D) folded into q. ------------------
    q = (jnp.dot(xq_ref[0], wq_ref[...], preferred_element_type=jnp.float32)
         + bq_ref[...]) * scale
    q = q.astype(cdt)                                                 # (tq, C)

    # ---- Per-head attention.  H is small -> static unroll; every head's
    # result goes straight into the y staging scratch, so no f32 accumulator
    # survives across iterations.
    # TODO(synk): for large H, switch to lax.fori_loop over heads (bounded live
    # ranges) or make heads a third "arbitrary" grid axis.
    for h in range(H):
        sl = slice(h * D, (h + 1) * D)
        kh = kv_buf[:, sl]                                            # (T_kv, D)
        vh = kv_buf[:, C + h * D: C + (h + 1) * D]                    # (T_kv, D)

        # Scores: contract the last axes of q_h and k_h (no explicit transpose).
        s = lax.dot_general(q[:, sl], kh, (((1,), (1,)), ((), ())),
                            preferred_element_type=jnp.float32)       # (tq, T_kv)

        # Softmax numerics in f32; normalization deferred to the PV output.
        s = s - jnp.max(s, axis=-1, keepdims=True)
        p = jnp.exp(s)
        denom = jnp.sum(p, axis=-1, keepdims=True)                    # (tq, 1)
        yh = jnp.dot(p.astype(cdt), vh,
                     preferred_element_type=jnp.float32)              # (tq, D)
        yh = yh * pl.reciprocal(denom, approx=True)                   # EUP slot
        y_buf[:, sl] = yh.astype(cdt)

    # ---- Single full-width output projection (K = C feeds the MXU well). ----
    out = jnp.dot(y_buf[...], wp_ref[...],
                  preferred_element_type=jnp.float32) + bp_ref[...]
    out_ref[0] = out.astype(out_ref.dtype)


def _pick_tq(T_q):
    """Full sequence if short; else a big multiple-of-8 tile.  The grid uses
    pl.cdiv, so a non-divisible tail is handled by Pallas block padding."""
    return T_q if T_q <= 512 else 512


def _vmem_cap_bytes():
    """~80% of physical VMEM (generation-aware); conservative fallback."""
    try:
        cap = getattr(pltpu.get_tpu_info(), "vmem_capacity_bytes", None)
        if cap:
            return int(cap * 0.8)
    except Exception:
        pass
    return 48 * 1024 * 1024     # safe even under v7x's 64 MiB physical VMEM


def cross_attention(x_q, x_kv, params, *, n_head, compute_dtype=None):
    """Eval-mode forward of the PyTorch CrossAttention module (no mask).

    compute_dtype: optionally cast activations + weights (e.g. jnp.bfloat16)
    for MXU throughput; softmax and all accumulation stay in f32 regardless.
    """
    if compute_dtype is not None:
        x_q = x_q.astype(compute_dtype)
        x_kv = x_kv.astype(compute_dtype)
        params = {k: v.astype(compute_dtype) for k, v in params.items()}

    B, T_q, C = x_q.shape
    T_kv = x_kv.shape[1]
    H = n_head
    D = C // H
    tq = _pick_tq(T_q)
    n_qi = pl.cdiv(T_q, tq)

    wq, bq, wkv, bkv, wp, bp = (params["wq"], params["bq"], params["wkv"],
                                params["bkv"], params["wp"], params["bp"])

    kernel = functools.partial(_cross_attn_kernel, n_head=H, head_dim=D)

    # --- Advisory cost estimate (K/V projection counted once per batch). -----
    flops = 2 * B * (T_q * C * C                 # Q projection
                     + T_kv * C * 2 * C          # K/V projection (once per b)
                     + 2 * H * T_q * T_kv * D    # scores + PV
                     + T_q * C * C)              # output projection
    it = jnp.dtype(x_q.dtype).itemsize
    bytes_accessed = it * (2 * B * T_q * C + B * T_kv * C + 4 * C * C + 4 * C)
    cost = pl.CostEstimate(flops=int(flops),
                           transcendentals=int(B * H * T_q * T_kv),
                           bytes_accessed=int(bytes_accessed))

    # --- VMEM budget: no double counting, ~25% headroom, per-generation cap. -
    weight_bytes = 2 * it * (4 * C * C + 4 * C)       # dbl-buffered, DMA'd once
    act_bytes = 2 * it * (2 * tq * C + T_kv * C)      # x_q / out / x_kv tiles
    scratch_bytes = it * (2 * T_kv * C + tq * C)      # KV cache + y staging
    f32_tmp_bytes = 4 * (2 * tq * C + 2 * tq * T_kv + 2 * T_kv * C + tq * D)
    est = weight_bytes + act_bytes + scratch_bytes + f32_tmp_bytes
    vmem_limit = int(min(_vmem_cap_bytes(),
                         max(int(est * 1.25), 32 * 1024 * 1024)))

    # TODO(synk): for very long T_kv (KV slab near the VMEM budget, esp. v7x),
    # add an innermost "arbitrary" KV grid axis with an online-softmax
    # accumulator, and single-buffer the grid-invariant weight / x_kv specs
    # (pipeline_mode=pl.Buffered(1)).
    return pl.pallas_call(
        kernel,
        out_shape=jax.ShapeDtypeStruct((B, T_q, C), x_q.dtype),
        grid=(B, n_qi),
        in_specs=[
            pl.BlockSpec((1, tq, C), lambda b, qi: (b, qi, 0)),     # x_q tile
            pl.BlockSpec((1, T_kv, C), lambda b, qi: (b, 0, 0)),    # x_kv (per b)
            pl.BlockSpec((C, C), lambda b, qi: (0, 0)),             # wq
            pl.BlockSpec((1, C), lambda b, qi: (0, 0)),             # bq
            pl.BlockSpec((C, 2 * C), lambda b, qi: (0, 0)),         # wkv
            pl.BlockSpec((1, 2 * C), lambda b, qi: (0, 0)),         # bkv
            pl.BlockSpec((C, C), lambda b, qi: (0, 0)),             # wp
            pl.BlockSpec((1, C), lambda b, qi: (0, 0)),             # bp
        ],
        out_specs=pl.BlockSpec((1, tq, C), lambda b, qi: (b, qi, 0)),
        scratch_shapes=[
            pltpu.VMEM((T_kv, 2 * C), x_q.dtype),   # cached K|V projections
            pltpu.VMEM((tq, C), x_q.dtype),         # per-head y staging buffer
        ],
        compiler_params=pltpu.CompilerParams(
            # qi must be "arbitrary": the K/V cache is filled at qi == 0 and
            # reused by later qi steps of the same batch element.  b stays
            # "parallel" so megacore (v7x) can split across batch.
            dimension_semantics=("parallel", "arbitrary"),
            vmem_limit_bytes=vmem_limit),
        cost_estimate=cost,
    )(x_q, x_kv, wq, bq, wkv, bkv, wp, bp)


def cross_attention_ref(x_q, x_kv, params, *, n_head):
    """Pure-JAX reference mirroring the PyTorch forward (eval mode, no mask)."""
    B, T_q, C = x_q.shape
    T_kv = x_kv.shape[1]
    D = C // n_head
    q = x_q @ params["wq"] + params["bq"][0]
    kv = x_kv @ params["wkv"] + params["bkv"][0]
    k, v = kv[..., :C], kv[..., C:]
    q = q.reshape(B, T_q, n_head, D).transpose(0, 2, 1, 3)
    k = k.reshape(B, T_kv, n_head, D).transpose(0, 2, 1, 3)
    v = v.reshape(B, T_kv, n_head, D).transpose(0, 2, 1, 3)
    att = jnp.einsum("bhqd,bhkd->bhqk", q, k) * (1.0 / math.sqrt(D))
    att = jax.nn.softmax(att, axis=-1)
    y = jnp.einsum("bhqk,bhkd->bhqd", att, v)
    y = y.transpose(0, 2, 1, 3).reshape(B, T_q, C)
    return y @ params["wp"] + params["bp"][0]


if __name__ == "__main__":
    # Small config consistent with the module: n_embd % n_head == 0.
    B, T_q, T_kv = 2, 8, 16
    n_embd, n_head = 32, 4

    key = jax.random.PRNGKey(0)
    ks = jax.random.split(key, 8)
    scale = 0.02
    params = {
        "wq":  scale * jax.random.normal(ks[0], (n_embd, n_embd), jnp.float32),
        "bq":  scale * jax.random.normal(ks[1], (1, n_embd), jnp.float32),
        "wkv": scale * jax.random.normal(ks[2], (n_embd, 2 * n_embd), jnp.float32),
        "bkv": scale * jax.random.normal(ks[3], (1, 2 * n_embd), jnp.float32),
        "wp":  scale * jax.random.normal(ks[4], (n_embd, n_embd), jnp.float32),
        "bp":  scale * jax.random.normal(ks[5], (1, n_embd), jnp.float32),
    }
    x_q = jax.random.normal(ks[6], (B, T_q, n_embd), jnp.float32)
    x_kv = jax.random.normal(ks[7], (B, T_kv, n_embd), jnp.float32)

    out = cross_attention(x_q, x_kv, params, n_head=n_head)
    out = jax.block_until_ready(out)

    ref = cross_attention_ref(x_q, x_kv, params, n_head=n_head)
    assert out.shape == (B, T_q, n_embd)
    # Tolerance accounts for the approximate (EUP) softmax reciprocal.
    assert jnp.allclose(out, ref, atol=2e-3, rtol=2e-3), "mismatch vs reference"

    print("KERNEL_OK")
</pallas_src>

<mosaic_0001>
module attributes {stable_mosaic.version = 11 : i64} {
  func.func @_cross_attn_kernel(%arg0: i32, %arg1: i32, %arg2: memref<1x8x32xf32, #tpu.memory_space<vmem>>, %arg3: memref<1x16x32xf32, #tpu.memory_space<vmem>>, %arg4: memref<32x32xf32, #tpu.memory_space<vmem>>, %arg5: memref<1x32xf32, #tpu.memory_space<vmem>>, %arg6: memref<32x64xf32, #tpu.memory_space<vmem>>, %arg7: memref<1x64xf32, #tpu.memory_space<vmem>>, %arg8: memref<32x32xf32, #tpu.memory_space<vmem>>, %arg9: memref<1x32xf32, #tpu.memory_space<vmem>>, %arg10: memref<1x8x32xf32, #tpu.memory_space<vmem>>, %arg11: memref<16x64xf32, #tpu.memory_space<vmem>>, %arg12: memref<8x32xf32, #tpu.memory_space<vmem>>) attributes {dimension_semantics = [#tpu.dimension_semantics<parallel>, #tpu.dimension_semantics<arbitrary>], iteration_bounds = array<i64: 2, 1>, scalar_prefetch = 0 : i64, scratch_operands = 2 : i64, tpu.core_type = #tpu.core_type<tc>, window_params = [{transform_indices = @transform_0, window_bounds = array<i64: 1, 8, 32>}, {transform_indices = @transform_1, window_bounds = array<i64: 1, 16, 32>}, {pipeline_mode = #tpu.pipeline_mode<synchronous>, transform_indices = @transform_2, window_bounds = array<i64: 32, 32>}, {pipeline_mode = #tpu.pipeline_mode<synchronous>, transform_indices = @transform_3, window_bounds = array<i64: 1, 32>}, {pipeline_mode = #tpu.pipeline_mode<synchronous>, transform_indices = @transform_4, window_bounds = array<i64: 32, 64>}, {pipeline_mode = #tpu.pipeline_mode<synchronous>, transform_indices = @transform_5, window_bounds = array<i64: 1, 64>}, {pipeline_mode = #tpu.pipeline_mode<synchronous>, transform_indices = @transform_6, window_bounds = array<i64: 32, 32>}, {pipeline_mode = #tpu.pipeline_mode<synchronous>, transform_indices = @transform_7, window_bounds = array<i64: 1, 32>}, {transform_indices = @transform_8, window_bounds = array<i64: 1, 8, 32>}]} {
    %c0_i32 = arith.constant 0 : i32
    %0 = arith.cmpi eq, %arg1, %c0_i32 : i32
    %1 = arith.extui %0 : i1 to i32
    %c0_i32_0 = arith.constant 0 : i32
    %2 = arith.cmpi ne, %1, %c0_i32_0 : i32
    scf.if %2 {
      %c0_51 = arith.constant 0 : index
      %c0_52 = arith.constant 0 : index
      %c0_53 = arith.constant 0 : index
      %85 = vector.load %arg3[%c0_51, %c0_52, %c0_53] : memref<1x16x32xf32, #tpu.memory_space<vmem>>, vector<1x16x32xf32>
      %86 = vector.shape_cast %85 : vector<1x16x32xf32> to vector<16x32xf32>
      %c0_54 = arith.constant 0 : index
      %c0_55 = arith.constant 0 : index
      %87 = vector.load %arg6[%c0_54, %c0_55] : memref<32x64xf32, #tpu.memory_space<vmem>>, vector<32x64xf32>
      %cst_56 = arith.constant dense<0.000000e+00> : vector<16x64xf32>
      %88 = tpu.matmul %86, %87, %cst_56 {dimension_numbers = #tpu.dot_dimension_numbers<[1], [0], [0], [1], [0, 0, 1, 1], [], []>} : vector<16x32xf32>, vector<32x64xf32>, vector<16x64xf32> -> vector<16x64xf32>
      %c0_57 = arith.constant 0 : index
      %c0_58 = arith.constant 0 : index
      %89 = vector.load %arg7[%c0_57, %c0_58] : memref<1x64xf32, #tpu.memory_space<vmem>>, vector<1x64xf32>
      %90 = vector.broadcast %89 : vector<1x64xf32> to vector<16x64xf32>
      %91 = arith.addf %88, %90 : vector<16x64xf32>
      %c0_59 = arith.constant 0 : index
      %c0_60 = arith.constant 0 : index
      %92 = vector.load %arg11[%c0_59, %c0_60] : memref<16x64xf32, #tpu.memory_space<vmem>>, vector<16x64xf32>
      tpu.vector_store %arg11[%c0_59, %c0_60], %91 {strides = array<i32>} : memref<16x64xf32, #tpu.memory_space<vmem>>, vector<16x64xf32>,
    } else {
    }
    %c0 = arith.constant 0 : index
    %c0_1 = arith.constant 0 : index
    %c0_2 = arith.constant 0 : index
    %3 = vector.load %arg2[%c0, %c0_1, %c0_2] : memref<1x8x32xf32, #tpu.memory_space<vmem>>, vector<1x8x32xf32>
    %4 = vector.shape_cast %3 : vector<1x8x32xf32> to vector<8x32xf32>
    %c0_3 = arith.constant 0 : index
    %c0_4 = arith.constant 0 : index
    %5 = vector.load %arg4[%c0_3, %c0_4] : memref<32x32xf32, #tpu.memory_space<vmem>>, vector<32x32xf32>
    %cst = arith.constant dense<0.000000e+00> : vector<8x32xf32>
    %6 = tpu.matmul %4, %5, %cst {dimension_numbers = #tpu.dot_dimension_numbers<[1], [0], [0], [1], [0, 0, 1, 1], [], []>} : vector<8x32xf32>, vector<32x32xf32>, vector<8x32xf32> -> vector<8x32xf32>
    %c0_5 = arith.constant 0 : index
    %c0_6 = arith.constant 0 : index
    %7 = vector.load %arg5[%c0_5, %c0_6] : memref<1x32xf32, #tpu.memory_space<vmem>>, vector<1x32xf32>
    %8 = vector.broadcast %7 : vector<1x32xf32> to vector<8x32xf32>
    %9 = arith.addf %6, %8 : vector<8x32xf32>
    %cst_7 = arith.constant 0.353553385 : f32
    %10 = vector.broadcast %cst_7 : f32 to vector<8x32xf32>
    %11 = arith.mulf %9, %10 : vector<8x32xf32>
    %c0_8 = arith.constant 0 : index
    %c0_9 = arith.constant 0 : index
    %12 = vector.load %arg11[%c0_8, %c0_9] : memref<16x64xf32, #tpu.memory_space<vmem>>, vector<16x8xf32>
    %c0_10 = arith.constant 0 : index
    %c32 = arith.constant 32 : index
    %13 = vector.load %arg11[%c0_10, %c32] : memref<16x64xf32, #tpu.memory_space<vmem>>, vector<16x8xf32>
    %14 = vector.extract_strided_slice %11 {offsets = [0, 0], sizes = [8, 8], strides = [1, 1]} : vector<8x32xf32> to vector<8x8xf32>
    %cst_11 = arith.constant dense<0.000000e+00> : vector<8x16xf32>
    %15 = tpu.matmul %14, %12, %cst_11 {dimension_numbers = #tpu.dot_dimension_numbers<[1], [1], [0], [0], [0, 0, 1, 0], [], []>} : vector<8x8xf32>, vector<16x8xf32>, vector<8x16xf32> -> vector<8x16xf32>
    %cst_12 = arith.constant dense<0xFF800000> : vector<8xf32>
    %16 = vector.multi_reduction <maximumf>, %15, %cst_12 [1] : vector<8x16xf32> to vector<8xf32>
    %17 = vector.shape_cast %16 : vector<8xf32> to vector<8x1xf32>
    %18 = vector.broadcast %17 : vector<8x1xf32> to vector<8x16xf32>
    %19 = arith.subf %15, %18 : vector<8x16xf32>
    %20 = math.exp %19 : vector<8x16xf32>
    %cst_13 = arith.constant dense<0.000000e+00> : vector<8xf32>
    %21 = vector.multi_reduction <add>, %20, %cst_13 [1] : vector<8x16xf32> to vector<8xf32>
    %22 = vector.shape_cast %21 : vector<8xf32> to vector<8x1xf32>
    %cst_14 = arith.constant dense<0.000000e+00> : vector<8x8xf32>
    %23 = tpu.matmul %20, %13, %cst_14 {dimension_numbers = #tpu.dot_dimension_numbers<[1], [0], [0], [1], [0, 0, 1, 1], [], []>} : vector<8x16xf32>, vector<16x8xf32>, vector<8x8xf32> -> vector<8x8xf32>
    %24 = tpu.reciprocal %22 {approx = true} : vector<8x1xf32> -> vector<8x1xf32>
    %25 = vector.broadcast %24 : vector<8x1xf32> to vector<8x8xf32>
    %26 = arith.mulf %23, %25 : vector<8x8xf32>
    %c0_15 = arith.constant 0 : index
    %c0_16 = arith.constant 0 : index
    %27 = vector.load %arg12[%c0_15, %c0_16] : memref<8x32xf32, #tpu.memory_space<vmem>>, vector<8x8xf32>
    tpu.vector_store %arg12[%c0_15, %c0_16], %26 {strides = array<i32>} : memref<8x32xf32, #tpu.memory_space<vmem>>, vector<8x8xf32>,
    %c0_17 = arith.constant 0 : index
    %c8 = arith.constant 8 : index
    %28 = vector.load %arg11[%c0_17, %c8] : memref<16x64xf32, #tpu.memory_space<vmem>>, vector<16x8xf32>
    %c0_18 = arith.constant 0 : index
    %c40 = arith.constant 40 : index
    %29 = vector.load %arg11[%c0_18, %c40] : memref<16x64xf32, #tpu.memory_space<vmem>>, vector<16x8xf32>
    %30 = vector.extract_strided_slice %11 {offsets = [0, 8], sizes = [8, 8], strides = [1, 1]} : vector<8x32xf32> to vector<8x8xf32>
    %cst_19 = arith.constant dense<0.000000e+00> : vector<8x16xf32>
    %31 = tpu.matmul %30, %28, %cst_19 {dimension_numbers = #tpu.dot_dimension_numbers<[1], [1], [0], [0], [0, 0, 1, 0], [], []>} : vector<8x8xf32>, vector<16x8xf32>, vector<8x16xf32> -> vector<8x16xf32>
    %cst_20 = arith.constant dense<0xFF800000> : vector<8xf32>
    %32 = vector.multi_reduction <maximumf>, %31, %cst_20 [1] : vector<8x16xf32> to vector<8xf32>
    %33 = vector.shape_cast %32 : vector<8xf32> to vector<8x1xf32>
    %34 = vector.broadcast %33 : vector<8x1xf32> to vector<8x16xf32>
    %35 = arith.subf %31, %34 : vector<8x16xf32>
    %36 = math.exp %35 : vector<8x16xf32>
    %cst_21 = arith.constant dense<0.000000e+00> : vector<8xf32>
    %37 = vector.multi_reduction <add>, %36, %cst_21 [1] : vector<8x16xf32> to vector<8xf32>
    %38 = vector.shape_cast %37 : vector<8xf32> to vector<8x1xf32>
    %cst_22 = arith.constant dense<0.000000e+00> : vector<8x8xf32>
    %39 = tpu.matmul %36, %29, %cst_22 {dimension_numbers = #tpu.dot_dimension_numbers<[1], [0], [0], [1], [0, 0, 1, 1], [], []>} : vector<8x16xf32>, vector<16x8xf32>, vector<8x8xf32> -> vector<8x8xf32>
    %40 = tpu.reciprocal %38 {approx = true} : vector<8x1xf32> -> vector<8x1xf32>
    %41 = vector.broadcast %40 : vector<8x1xf32> to vector<8x8xf32>
    %42 = arith.mulf %39, %41 : vector<8x8xf32>
    %c0_23 = arith.constant 0 : index
    %c8_24 = arith.constant 8 : index
    %43 = vector.load %arg12[%c0_23, %c8_24] : memref<8x32xf32, #tpu.memory_space<vmem>>, vector<8x8xf32>
    tpu.vector_store %arg12[%c0_23, %c8_24], %42 {strides = array<i32>} : memref<8x32xf32, #tpu.memory_space<vmem>>, vector<8x8xf32>,
    %c0_25 = arith.constant 0 : index
    %c16 = arith.constant 16 : index
    %44 = vector.load %arg11[%c0_25, %c16] : memref<16x64xf32, #tpu.memory_space<vmem>>, vector<16x8xf32>
    %c0_26 = arith.constant 0 : index
    %c48 = arith.constant 48 : index
    %45 = vector.load %arg11[%c0_26, %c48] : memref<16x64xf32, #tpu.memory_space<vmem>>, vector<16x8xf32>
    %46 = vector.extract_strided_slice %11 {offsets = [0, 16], sizes = [8, 8], strides = [1, 1]} : vector<8x32xf32> to vector<8x8xf32>
    %cst_27 = arith.constant dense<0.000000e+00> : vector<8x16xf32>
    %47 = tpu.matmul %46, %44, %cst_27 {dimension_numbers = #tpu.dot_dimension_numbers<[1], [1], [0], [0], [0, 0, 1, 0], [], []>} : vector<8x8xf32>, vector<16x8xf32>, vector<8x16xf32> -> vector<8x16xf32>
    %cst_28 = arith.constant dense<0xFF800000> : vector<8xf32>
    %48 = vector.multi_reduction <maximumf>, %47, %cst_28 [1] : vector<8x16xf32> to vector<8xf32>
    %49 = vector.shape_cast %48 : vector<8xf32> to vector<8x1xf32>
    %50 = vector.broadcast %49 : vector<8x1xf32> to vector<8x16xf32>
    %51 = arith.subf %47, %50 : vector<8x16xf32>
    %52 = math.exp %51 : vector<8x16xf32>
    %cst_29 = arith.constant dense<0.000000e+00> : vector<8xf32>
    %53 = vector.multi_reduction <add>, %52, %cst_29 [1] : vector<8x16xf32> to vector<8xf32>
    %54 = vector.shape_cast %53 : vector<8xf32> to vector<8x1xf32>
    %cst_30 = arith.constant dense<0.000000e+00> : vector<8x8xf32>
    %55 = tpu.matmul %52, %45, %cst_30 {dimension_numbers = #tpu.dot_dimension_numbers<[1], [0], [0], [1], [0, 0, 1, 1], [], []>} : vector<8x16xf32>, vector<16x8xf32>, vector<8x8xf32> -> vector<8x8xf32>
    %56 = tpu.reciprocal %54 {approx = true} : vector<8x1xf32> -> vector<8x1xf32>
    %57 = vector.broadcast %56 : vector<8x1xf32> to vector<8x8xf32>
    %58 = arith.mulf %55, %57 : vector<8x8xf32>
    %c0_31 = arith.constant 0 : index
    %c16_32 = arith.constant 16 : index
    %59 = vector.load %arg12[%c0_31, %c16_32] : memref<8x32xf32, #tpu.memory_space<vmem>>, vector<8x8xf32>
    tpu.vector_store %arg12[%c0_31, %c16_32], %58 {strides = array<i32>} : memref<8x32xf32, #tpu.memory_space<vmem>>, vector<8x8xf32>,
    %c0_33 = arith.constant 0 : index
    %c24 = arith.constant 24 : index
    %60 = vector.load %arg11[%c0_33, %c24] : memref<16x64xf32, #tpu.memory_space<vmem>>, vector<16x8xf32>
    %c0_34 = arith.constant 0 : index
    %c56 = arith.constant 56 : index
    %61 = vector.load %arg11[%c0_34, %c56] : memref<16x64xf32, #tpu.memory_space<vmem>>, vector<16x8xf32>
    %62 = vector.extract_strided_slice %11 {offsets = [0, 24], sizes = [8, 8], strides = [1, 1]} : vector<8x32xf32> to vector<8x8xf32>
    %cst_35 = arith.constant dense<0.000000e+00> : vector<8x16xf32>
    %63 = tpu.matmul %62, %60, %cst_35 {dimension_numbers = #tpu.dot_dimension_numbers<[1], [1], [0], [0], [0, 0, 1, 0], [], []>} : vector<8x8xf32>, vector<16x8xf32>, vector<8x16xf32> -> vector<8x16xf32>
    %cst_36 = arith.constant dense<0xFF800000> : vector<8xf32>
    %64 = vector.multi_reduction <maximumf>, %63, %cst_36 [1] : vector<8x16xf32> to vector<8xf32>
    %65 = vector.shape_cast %64 : vector<8xf32> to vector<8x1xf32>
    %66 = vector.broadcast %65 : vector<8x1xf32> to vector<8x16xf32>
    %67 = arith.subf %63, %66 : vector<8x16xf32>
    %68 = math.exp %67 : vector<8x16xf32>
    %cst_37 = arith.constant dense<0.000000e+00> : vector<8xf32>
    %69 = vector.multi_reduction <add>, %68, %cst_37 [1] : vector<8x16xf32> to vector<8xf32>
    %70 = vector.shape_cast %69 : vector<8xf32> to vector<8x1xf32>
    %cst_38 = arith.constant dense<0.000000e+00> : vector<8x8xf32>
    %71 = tpu.matmul %68, %61, %cst_38 {dimension_numbers = #tpu.dot_dimension_numbers<[1], [0], [0], [1], [0, 0, 1, 1], [], []>} : vector<8x16xf32>, vector<16x8xf32>, vector<8x8xf32> -> vector<8x8xf32>
    %72 = tpu.reciprocal %70 {approx = true} : vector<8x1xf32> -> vector<8x1xf32>
    %73 = vector.broadcast %72 : vector<8x1xf32> to vector<8x8xf32>
    %74 = arith.mulf %71, %73 : vector<8x8xf32>
    %c0_39 = arith.constant 0 : index
    %c24_40 = arith.constant 24 : index
    %75 = vector.load %arg12[%c0_39, %c24_40] : memref<8x32xf32, #tpu.memory_space<vmem>>, vector<8x8xf32>
    tpu.vector_store %arg12[%c0_39, %c24_40], %74 {strides = array<i32>} : memref<8x32xf32, #tpu.memory_space<vmem>>, vector<8x8xf32>,
    %c0_41 = arith.constant 0 : index
    %c0_42 = arith.constant 0 : index
    %76 = vector.load %arg12[%c0_41, %c0_42] : memref<8x32xf32, #tpu.memory_space<vmem>>, vector<8x32xf32>
    %c0_43 = arith.constant 0 : index
    %c0_44 = arith.constant 0 : index
    %77 = vector.load %arg8[%c0_43, %c0_44] : memref<32x32xf32, #tpu.memory_space<vmem>>, vector<32x32xf32>
    %cst_45 = arith.constant dense<0.000000e+00> : vector<8x32xf32>
    %78 = tpu.matmul %76, %77, %cst_45 {dimension_numbers = #tpu.dot_dimension_numbers<[1], [0], [0], [1], [0, 0, 1, 1], [], []>} : vector<8x32xf32>, vector<32x32xf32>, vector<8x32xf32> -> vector<8x32xf32>
    %c0_46 = arith.constant 0 : index
    %c0_47 = arith.constant 0 : index
    %79 = vector.load %arg9[%c0_46, %c0_47] : memref<1x32xf32, #tpu.memory_space<vmem>>, vector<1x32xf32>
    %80 = vector.broadcast %79 : vector<1x32xf32> to vector<8x32xf32>
    %81 = arith.addf %78, %80 : vector<8x32xf32>
    %c0_48 = arith.constant 0 : index
    %c0_49 = arith.constant 0 : index
    %c0_50 = arith.constant 0 : index
    %82 = vector.load %arg10[%c0_48, %c0_49, %c0_50] : memref<1x8x32xf32, #tpu.memory_space<vmem>>, vector<1x8x32xf32>
    %83 = vector.shape_cast %82 : vector<1x8x32xf32> to vector<8x32xf32>
    %84 = vector.shape_cast %81 : vector<8x32xf32> to vector<1x8x32xf32>
    tpu.vector_store %arg10[%c0_48, %c0_49, %c0_50], %84 {strides = array<i32>} : memref<1x8x32xf32, #tpu.memory_space<vmem>>, vector<1x8x32xf32>,
    return
  }
  func.func @transform_0(%arg0: i32, %arg1: i32) -> (i32, i32, i32) {
    %c0_i32 = arith.constant 0 : i32
    %c0_i32_0 = arith.constant 0 : i32
    return %arg0, %arg1, %c0_i32 : i32, i32, i32
  }
  func.func @transform_1(%arg0: i32, %arg1: i32) -> (i32, i32, i32) {
    %c0_i32 = arith.constant 0 : i32
    %c0_i32_0 = arith.constant 0 : i32
    %c0_i32_1 = arith.constant 0 : i32
    return %arg0, %c0_i32, %c0_i32_0 : i32, i32, i32
  }
  func.func @transform_2(%arg0: i32, %arg1: i32) -> (i32, i32) {
    %c0_i32 = arith.constant 0 : i32
    %c0_i32_0 = arith.constant 0 : i32
    %c0_i32_1 = arith.constant 0 : i32
    return %c0_i32, %c0_i32_0 : i32, i32
  }
  func.func @transform_3(%arg0: i32, %arg1: i32) -> (i32, i32) {
    %c0_i32 = arith.constant 0 : i32
    %c0_i32_0 = arith.constant 0 : i32
    %c0_i32_1 = arith.constant 0 : i32
    return %c0_i32, %c0_i32_0 : i32, i32
  }
  func.func @transform_4(%arg0: i32, %arg1: i32) -> (i32, i32) {
    %c0_i32 = arith.constant 0 : i32
    %c0_i32_0 = arith.constant 0 : i32
    %c0_i32_1 = arith.constant 0 : i32
    return %c0_i32, %c0_i32_0 : i32, i32
  }
  func.func @transform_5(%arg0: i32, %arg1: i32) -> (i32, i32) {
    %c0_i32 = arith.constant 0 : i32
    %c0_i32_0 = arith.constant 0 : i32
    %c0_i32_1 = arith.constant 0 : i32
    return %c0_i32, %c0_i32_0 : i32, i32
  }
  func.func @transform_6(%arg0: i32, %arg1: i32) -> (i32, i32) {
    %c0_i32 = arith.constant 0 : i32
    %c0_i32_0 = arith.constant 0 : i32
    %c0_i32_1 = arith.constant 0 : i32
    return %c0_i32, %c0_i32_0 : i32, i32
  }
  func.func @transform_7(%arg0: i32, %arg1: i32) -> (i32, i32) {
    %c0_i32 = arith.constant 0 : i32
    %c0_i32_0 = arith.constant 0 : i32
    %c0_i32_1 = arith.constant 0 : i32
    return %c0_i32, %c0_i32_0 : i32, i32
  }
  func.func @transform_8(%arg0: i32, %arg1: i32) -> (i32, i32, i32) {
    %c0_i32 = arith.constant 0 : i32
    %c0_i32_0 = arith.constant 0 : i32
    return %arg0, %arg1, %c0_i32 : i32, i32, i32
  }
}

</mosaic_0001>

<llo_original>
// kernel: tpu_custom_call.1
$region0: #{tpu_custom_call.1}
  #allocation0 [shape = 'u32[]', space=smem, size = 0x4, offset = 0x4, fixed_abs, tag = 'smem constant byte address 0x4 - core index']
  #allocation1 [shape = 'u32[72,128]{1,0:T(1,128)}', space=vmem, size = 0x9000, scoped, tag = 'internal scratch']
  #allocation2 [shape = 'f32[16,64]{1,0:T(8,128)}', space=vmem, size = 0x2000, scoped, tag = 'scratch operand']
  #allocation3 [shape = 'f32[8,32]{1,0:T(8,128)}', space=vmem, size = 0x1000, scoped, tag = 'scratch operand']
  %s0 = inlined_call_operand.hbm [shape: f32[2,8,32], index: 0, kind: input, shape index: {}]
  %s1 = inlined_call_operand.hbm [shape: f32[2,16,32], index: 1, kind: input, shape index: {}]
  %s2 = inlined_call_operand.hbm [shape: f32[32,32], index: 2, kind: input, shape index: {}]
  %s3 = inlined_call_operand.vmem [shape: f32[1,32], index: 3, kind: input, shape index: {}]
  %s4 = inlined_call_operand.hbm [shape: f32[32,64], index: 4, kind: input, shape index: {}]
  %s5 = inlined_call_operand.vmem [shape: f32[1,64], index: 5, kind: input, shape index: {}]
  %s6 = inlined_call_operand.hbm [shape: f32[32,32], index: 6, kind: input, shape index: {}]
  %s7 = inlined_call_operand.vmem [shape: f32[1,32], index: 7, kind: input, shape index: {}]
  %s8 = inlined_call_operand.hbm [shape: f32[2,8,32], index: 8, kind: output, shape index: {}]
  %s9 = sld [smem:[#allocation0]]
  $region89: #{tpu_custom_call.1} parent=0
    _
  %s11 = ssub.s32 1, %s9
  %s12 = scalar_select 0, %s11, %s9
  $region1: #{tpu_custom_call.1} parent=0
    #allocation4 [shape = 'u8[8192]{0}', space=vmem, size = 0x2000, scoped, tag = 'input window, operand 0']
    #allocation5 [shape = 's32[2]{0}', space=sflag, size = 0x8, scoped, tag = 'scoped memory for tpu_custom_call.1']
    #allocation6 [shape = 's32[2]{0}', space=sflag, size = 0x8, scoped, tag = 'scoped memory for tpu_custom_call.1']
    #allocation7 [shape = 'u8[16384]{0}', space=vmem, size = 0x4000, scoped, tag = 'input window, operand 1']
    #allocation8 [shape = 's32[2]{0}', space=sflag, size = 0x8, scoped, tag = 'scoped memory for tpu_custom_call.1']
    #allocation9 [shape = 'u8[16384]{0}', space=vmem, size = 0x4000, scoped, tag = 'input window, operand 2, single buffered']
    #allocation10 [shape = 'u8[16384]{0}', space=vmem, size = 0x4000, scoped, tag = 'input window, operand 4, single buffered']
    #allocation11 [shape = 's32[1]{0}', space=sflag, size = 0x4, scoped, tag = 'scoped memory for tpu_custom_call.1']
    #allocation12 [shape = 'u8[16384]{0}', space=vmem, size = 0x4000, scoped, tag = 'input window, operand 6, single buffered']
    #allocation13 [shape = 'u8[8192]{0}', space=vmem, size = 0x2000, scoped, tag = 'output window, operand 0']
    %13 = vsyncpa [#allocation5], 0
    %s14 = scalar_lea.sflag [#allocation5], 1
    %15 = vsyncpa %s14, 0
    %16 = vsyncpa [#allocation8], 0
    %s17 = scalar_lea.sflag [#allocation8], 1
    %18 = vsyncpa %s17, 0
    %19 = vsyncpa [#allocation11], 0
    %20 = vsyncpa [#allocation6], 0
    %s21 = scalar_lea.sflag [#allocation6], 1
    %22 = vsyncpa %s21, 0
    loop: start=0, step=1, limit=4
    $region2: #{tpu_custom_call.1} parent=1 // loop_pre_header
      _
    $region3: #{tpu_custom_call.1} parent=1 // loop_header
      %s24 = sphi 0, %s28
      %p25 = scmp.ge.s32.totalorder %s24, 4
      %s31 = sphi 0, %s43
      %s32 = sphi 0, %s39
      %s33 = sphi 0, %s31
      %s34 = sphi 0, %s32
      %s35 = sphi 0, %s33
      %s36 = sphi 0, %s34
      %s48 = sphi 0, %s50
      %s51 = sphi 0, %s48
      %s52 = sphi 0, %s51
      %s68 = sphi 0, %s52
      %s74 = sphi 0, %s76
      %s77 = sphi 0, %s74
      %s78 = sphi 0, %s77
      %s94 = sphi 0, %s78
      %s98 = sphi 0, %s98
      %s100 = sphi 0, %s98
      %s101 = sphi 0, %s100
      %s115 = sphi 0, %s101
      %s119 = sphi 0, %s119
      %s121 = sphi 0, %s119
      %s122 = sphi 0, %s121
      %s136 = sphi 0, %s122
      %s140 = sphi 0, %s140
      %s142 = sphi 0, %s140
      %s143 = sphi 0, %s142
      %s157 = sphi 0, %s143
      %s161 = sphi 0, %s161
      %s163 = sphi 0, %s161
      %s164 = sphi 0, %s163
      %s178 = sphi 0, %s164
      %s182 = sphi 0, %s182
      %s184 = sphi 0, %s182
      %s185 = sphi 0, %s184
      %s199 = sphi 0, %s185
      %s203 = sphi 0, %s203
      %s205 = sphi 0, %s203
      %s206 = sphi 0, %s205
      %s220 = sphi 0, %s206
      %s228 = sphi 0, %s230
      %s231 = sphi 0, %s228
      %s232 = sphi 0, %s231
      %s248 = sphi 0, %s232
    $region4: #{tpu_custom_call.1} parent=1 // loop_header_branch
      %27 = sbr.rel (%p25) target = $region8
    $region5: #{tpu_custom_call.1} parent=1 // loop_body
      %s29 = ssub.s32 %s24, 1
      %s30 = ssub.s32 %s24, 2
      %s37 = sadd.s32 1, %s32
      %p38 = scmp.ge.s32.totalorder %s37, 1
      %s39 = scalar_select %p38, 0, %s37
      %s40 = sadd.s32 1, %s31
      %s41 = scalar_select %p38, %s40, %s31
      %p42 = scmp.ge.s32.totalorder %s41, 2
      %s43 = scalar_select %p42, 0, %s41
      %s44 = ssub.s32 %s31, %s43
      %s45 = ssub.s32 %s32, %s39
      %s46 = sor.u32 %s44, %s45
      %p47 = scmp.eq.s32.totalorder %s46, 0
      %s49 = sadd.s32 %s48, 1
      %s50 = scalar_select %p47, %s48, %s49
      %p53 = pneg %p47
      %p54 = scmp.eq.s32.totalorder %s24, 1
      %p55 = por %p53, %p54
      %p56 = scmp.ne.s32.totalorder %s48, %s51
      %p57 = scmp.eq.s32.totalorder %s24, 0
      %p58 = por %p56, %p57
      %p59 = scmp.ne.s32.totalorder %s48, %s51
      %p60 = scmp.eq.s32.totalorder %s29, 1
      %p61 = por %p59, %p60
      %p62 = scmp.ne.s32.totalorder %s51, %s52
      %p63 = scmp.eq.s32.totalorder %s29, 0
      %p64 = por %p62, %p63
      %p65 = scmp.ne.s32.totalorder %s51, %s52
      %p66 = scmp.eq.s32.totalorder %s30, 1
      %p67 = por %p65, %p66
      %p69 = scmp.ne.s32.totalorder %s52, %s68
      %p70 = scmp.eq.s32.totalorder %s30, 0
      %p71 = por %p69, %p70
      %s72 = ssub.s32 %s31, %s43
      %p73 = scmp.eq.s32.totalorder %s72, 0
      %s75 = sadd.s32 %s74, 1
      %s76 = scalar_select %p73, %s74, %s75
      %p79 = pneg %p73
      %p80 = scmp.eq.s32.totalorder %s24, 1
      %p81 = por %p79, %p80
      %p82 = scmp.ne.s32.totalorder %s74, %s77
      %p83 = scmp.eq.s32.totalorder %s24, 0
      %p84 = por %p82, %p83
      %p85 = scmp.ne.s32.totalorder %s74, %s77
      %p86 = scmp.eq.s32.totalorder %s29, 1
      %p87 = por %p85, %p86
      %p88 = scmp.ne.s32.totalorder %s77, %s78
      %p89 = scmp.eq.s32.totalorder %s29, 0
      %p90 = por %p88, %p89
      %p91 = scmp.ne.s32.totalorder %s77, %s78
      %p92 = scmp.eq.s32.totalorder %s30, 1
      %p93 = por %p91, %p92
      %p95 = scmp.ne.s32.totalorder %s78, %s94
      %p96 = scmp.eq.s32.totalorder %s30, 0
      %p97 = por %p95, %p96
      %s99 = sadd.s32 %s98, 1
      %p102 = scmp.eq.s32.totalorder %s24, 1
      %p103 = scmp.ne.s32.totalorder %s98, %s100
      %p104 = scmp.eq.s32.totalorder %s24, 0
      %p105 = por %p103, %p104
      %p106 = scmp.ne.s32.totalorder %s98, %s100
      %p107 = scmp.eq.s32.totalorder %s29, 1
      %p108 = por %p106, %p107
      %p109 = scmp.ne.s32.totalorder %s100, %s101
      %p110 = scmp.eq.s32.totalorder %s29, 0
      %p111 = por %p109, %p110
      %p112 = scmp.ne.s32.totalorder %s100, %s101
      %p113 = scmp.eq.s32.totalorder %s30, 1
      %p114 = por %p112, %p113
      %p116 = scmp.ne.s32.totalorder %s101, %s115
      %p117 = scmp.eq.s32.totalorder %s30, 0
      %p118 = por %p116, %p117
      %s120 = sadd.s32 %s119, 1
      %p123 = scmp.eq.s32.totalorder %s24, 1
      %p124 = scmp.ne.s32.totalorder %s119, %s121
      %p125 = scmp.eq.s32.totalorder %s24, 0
      %p126 = por %p124, %p125
      %p127 = scmp.ne.s32.totalorder %s119, %s121
      %p128 = scmp.eq.s32.totalorder %s29, 1
      %p129 = por %p127, %p128
      %p130 = scmp.ne.s32.totalorder %s121, %s122
      %p131 = scmp.eq.s32.totalorder %s29, 0
      %p132 = por %p130, %p131
      %p133 = scmp.ne.s32.totalorder %s121, %s122
      %p134 = scmp.eq.s32.totalorder %s30, 1
      %p135 = por %p133, %p134
      %p137 = scmp.ne.s32.totalorder %s122, %s136
      %p138 = scmp.eq.s32.totalorder %s30, 0
      %p139 = por %p137, %p138
      %s141 = sadd.s32 %s140, 1
      %p144 = scmp.eq.s32.totalorder %s24, 1
      %p145 = scmp.ne.s32.totalorder %s140, %s142
      %p146 = scmp.eq.s32.totalorder %s24, 0
      %p147 = por %p145, %p146
      %p148 = scmp.ne.s32.totalorder %s140, %s142
      %p149 = scmp.eq.s32.totalorder %s29, 1
      %p150 = por %p148, %p149
      %p151 = scmp.ne.s32.totalorder %s142, %s143
      %p152 = scmp.eq.s32.totalorder %s29, 0
      %p153 = por %p151, %p152
      %p154 = scmp.ne.s32.totalorder %s142, %s143
      %p155 = scmp.eq.s32.totalorder %s30, 1
      %p156 = por %p154, %p155
      %p158 = scmp.ne.s32.totalorder %s143, %s157
      %p159 = scmp.eq.s32.totalorder %s30, 0
      %p160 = por %p158, %p159
      %s162 = sadd.s32 %s161, 1
      %p165 = scmp.eq.s32.totalorder %s24, 1
      %p166 = scmp.ne.s32.totalorder %s161, %s163
      %p167 = scmp.eq.s32.totalorder %s24, 0
      %p168 = por %p166, %p167
      %p169 = scmp.ne.s32.totalorder %s161, %s163
      %p170 = scmp.eq.s32.totalorder %s29, 1
      %p171 = por %p169, %p170
      %p172 = scmp.ne.s32.totalorder %s163, %s164
      %p173 = scmp.eq.s32.totalorder %s29, 0
      %p174 = por %p172, %p173
      %p175 = scmp.ne.s32.totalorder %s163, %s164
      %p176 = scmp.eq.s32.totalorder %s30, 1
      %p177 = por %p175, %p176
      %p179 = scmp.ne.s32.totalorder %s164, %s178
      %p180 = scmp.eq.s32.totalorder %s30, 0
      %p181 = por %p179, %p180
      %s183 = sadd.s32 %s182, 1
      %p186 = scmp.eq.s32.totalorder %s24, 1
      %p187 = scmp.ne.s32.totalorder %s182, %s184
      %p188 = scmp.eq.s32.totalorder %s24, 0
      %p189 = por %p187, %p188
      %p190 = scmp.ne.s32.totalorder %s182, %s184
      %p191 = scmp.eq.s32.totalorder %s29, 1
      %p192 = por %p190, %p191
      %p193 = scmp.ne.s32.totalorder %s184, %s185
      %p194 = scmp.eq.s32.totalorder %s29, 0
      %p195 = por %p193, %p194
      %p196 = scmp.ne.s32.totalorder %s184, %s185
      %p197 = scmp.eq.s32.totalorder %s30, 1
      %p198 = por %p196, %p197
      %p200 = scmp.ne.s32.totalorder %s185, %s199
      %p201 = scmp.eq.s32.totalorder %s30, 0
      %p202 = por %p200, %p201
      %s204 = sadd.s32 %s203, 1
      %p207 = scmp.eq.s32.totalorder %s24, 1
      %p208 = scmp.ne.s32.totalorder %s203, %s205
      %p209 = scmp.eq.s32.totalorder %s24, 0
      %p210 = por %p208, %p209
      %p211 = scmp.ne.s32.totalorder %s203, %s205
      %p212 = scmp.eq.s32.totalorder %s29, 1
      %p213 = por %p211, %p212
      %p214 = scmp.ne.s32.totalorder %s205, %s206
      %p215 = scmp.eq.s32.totalorder %s29, 0
      %p216 = por %p214, %p215
      %p217 = scmp.ne.s32.totalorder %s205, %s206
      %p218 = scmp.eq.s32.totalorder %s30, 1
      %p219 = por %p217, %p218
      %p221 = scmp.ne.s32.totalorder %s206, %s220
      %p222 = scmp.eq.s32.totalorder %s30, 0
      %p223 = por %p221, %p222
      %s224 = ssub.s32 %s31, %s43
      %s225 = ssub.s32 %s32, %s39
      %s226 = sor.u32 %s224, %s225
      %p227 = scmp.eq.s32.totalorder %s226, 0
      %s229 = sadd.s32 %s228, 1
      %s230 = scalar_select %p227, %s228, %s229
      %p233 = pneg %p227
      %p234 = scmp.eq.s32.totalorder %s24, 1
      %p235 = por %p233, %p234
      %p236 = scmp.ne.s32.totalorder %s228, %s231
      %p237 = scmp.eq.s32.totalorder %s24, 0
      %p238 = por %p236, %p237
      %p239 = scmp.ne.s32.totalorder %s228, %s231
      %p240 = scmp.eq.s32.totalorder %s29, 1
      %p241 = por %p239, %p240
      %p242 = scmp.ne.s32.totalorder %s231, %s232
      %p243 = scmp.eq.s32.totalorder %s29, 0
      %p244 = por %p242, %p243
      %p245 = scmp.ne.s32.totalorder %s231, %s232
      %p246 = scmp.eq.s32.totalorder %s30, 1
      %p247 = por %p245, %p246
      %p249 = scmp.ne.s32.totalorder %s232, %s248
      %p250 = scmp.eq.s32.totalorder %s30, 0
      %p251 = por %p249, %p250
      %p252 = scmp.le.s32.totalorder 1, %s24
      %p253 = scmp.lt.s32.totalorder %s24, 3
      %p254 = pnand %p252, %p253
      %p255 = pneg %p254
      // Predicated region
      $region9: #{tpu_custom_call.1} parent=5 // pred_check
        _
      $region10: #{tpu_custom_call.1} parent=5 // pred_check_branch
        %257 = sbr.rel (%p254) target = $region12
      $region11: #{tpu_custom_call.1} parent=5 // pred_region
        %s258 = ssub.s32 %s24, 1
        // Predicated region
        $region13: #{tpu_custom_call.1} parent=11 // pred_check
          %p259 = pneg %p111
        $region14: #{tpu_custom_call.1} parent=11 // pred_check_branch
          %261 = sbr.rel (%p259) target = $region16
        $region15: #{tpu_custom_call.1} parent=11 // pred_region
          %263 = vsyncadd [#allocation8], 0
          %s264 = sshll.u32 %s2, 4
          %s265 = int_to_ptr.hbm [resolvable:$true] %s264
          %s266 = sshll.u32 [#allocation9], 4
          %s267 = int_to_ptr.vmem [resolvable:$true] %s266
          %272 = dma.hbm_to_vmem [thread:$0]  %s265, 512, %s267, [#allocation8], 128, 128, 8
        $region16: #{tpu_custom_call.1} parent=11 // pred_fallthru
          _
        // Predicated region
        $region17: #{tpu_custom_call.1} parent=11 // pred_check
          %p273 = pneg %p132
        $region18: #{tpu_custom_call.1} parent=11 // pred_check_branch
          %275 = sbr.rel (%p273) target = $region20
        $region19: #{tpu_custom_call.1} parent=11 // pred_region
          _
        $region20: #{tpu_custom_call.1} parent=11 // pred_fallthru
          _
        // Predicated region
        $region21: #{tpu_custom_call.1} parent=11 // pred_check
          %p276 = pneg %p153
        $region22: #{tpu_custom_call.1} parent=11 // pred_check_branch
          %278 = sbr.rel (%p276) target = $region24
        $region23: #{tpu_custom_call.1} parent=11 // pred_region
          %280 = vsyncadd [#allocation11], 0
          %s281 = sshll.u32 %s4, 4
          %s282 = int_to_ptr.hbm [resolvable:$true] %s281
          %s283 = sshll.u32 [#allocation10], 4
          %s284 = int_to_ptr.vmem [resolvable:$true] %s283
          %289 = dma.hbm_to_vmem [thread:$0]  %s282, 512, %s284, [#allocation11], 128, 128, 8
        $region24: #{tpu_custom_call.1} parent=11 // pred_fallthru
          _
        // Predicated region
        $region25: #{tpu_custom_call.1} parent=11 // pred_check
          %p290 = pneg %p174
        $region26: #{tpu_custom_call.1} parent=11 // pred_check_branch
          %292 = sbr.rel (%p290) target = $region28
        $region27: #{tpu_custom_call.1} parent=11 // pred_region
          _
        $region28: #{tpu_custom_call.1} parent=11 // pred_fallthru
          _
        // Predicated region
        $region29: #{tpu_custom_call.1} parent=11 // pred_check
          %p293 = pneg %p195
        $region30: #{tpu_custom_call.1} parent=11 // pred_check_branch
          %295 = sbr.rel (%p293) target = $region32
        $region31: #{tpu_custom_call.1} parent=11 // pred_region
          %297 = vsyncadd [#allocation11], 0
          %s298 = sshll.u32 %s6, 4
          %s299 = int_to_ptr.hbm [resolvable:$true] %s298
          %s300 = sshll.u32 [#allocation12], 4
          %s301 = int_to_ptr.vmem [resolvable:$true] %s300
          %306 = dma.hbm_to_vmem [thread:$0]  %s299, 512, %s301, [#allocation11], 128, 128, 8
        $region32: #{tpu_custom_call.1} parent=11 // pred_fallthru
          _
        // Predicated region
        $region33: #{tpu_custom_call.1} parent=11 // pred_check
          %p307 = pneg %p216
        $region34: #{tpu_custom_call.1} parent=11 // pred_check_branch
          %309 = sbr.rel (%p307) target = $region36
        $region35: #{tpu_custom_call.1} parent=11 // pred_region
          _
        $region36: #{tpu_custom_call.1} parent=11 // pred_fallthru
          _
      $region12: #{tpu_custom_call.1} parent=5 // pred_fallthru
        _
      %p310 = scmp.lt.s32.totalorder %s24, 2
      // Predicated region
      $region37: #{tpu_custom_call.1} parent=5 // pred_check
        %p311 = pneg %p310
      $region38: #{tpu_custom_call.1} parent=5 // pred_check_branch
        %313 = sbr.rel (%p311) target = $region40
      $region39: #{tpu_custom_call.1} parent=5 // pred_region
        // Predicated region
        $region41: #{tpu_custom_call.1} parent=39 // pred_check
          %p314 = pneg %p58
        $region42: #{tpu_custom_call.1} parent=39 // pred_check_branch
          %316 = sbr.rel (%p314) target = $region44
        $region43: #{tpu_custom_call.1} parent=39 // pred_region
          %s317 = sand.u32 %s48, 1
          %s318 = scalar_lea.sflag [#allocation5], %s317
          %s319 = sand.u32 %s48, 1
          %s320 = smul.addr %s319, 8
          %s321 = scalar_lea.vmem [#allocation4], %s320
          %323 = vsyncadd %s318, 0
          %s324 = sadd.s32 %s32, %s31
          %s325 = smul.addr %s324, 8
          %s326 = scalar_lea.hbm %s0, %s325
          %s328 = sshll.u32 %s326, 4
          %s329 = int_to_ptr.hbm [resolvable:$true] %s328
          %s330 = sshll.u32 %s321, 4
          %s331 = int_to_ptr.vmem [resolvable:$true] %s330
          %333 = dma.hbm_to_vmem [thread:$0]  %s329, 128, %s331, %s318
        $region44: #{tpu_custom_call.1} parent=39 // pred_fallthru
          _
        // Predicated region
        $region45: #{tpu_custom_call.1} parent=39 // pred_check
          %p334 = pneg %p84
        $region46: #{tpu_custom_call.1} parent=39 // pred_check_branch
          %336 = sbr.rel (%p334) target = $region48
        $region47: #{tpu_custom_call.1} parent=39 // pred_region
          %s337 = sand.u32 %s24, 1
          %s338 = scalar_lea.sflag [#allocation8], %s337
          %s339 = sand.u32 %s74, 1
          %s340 = smul.addr %s339, 16
          %s341 = scalar_lea.vmem [#allocation7], %s340
          %343 = vsyncadd %s338, 0
          %s344 = smul.addr %s31, 2
          %s345 = smul.addr %s344, 8
          %s346 = scalar_lea.hbm %s1, %s345
          %s347 = sshll.u32 %s346, 4
          %s348 = int_to_ptr.hbm [resolvable:$true] %s347
          %s349 = sshll.u32 %s341, 4
          %s350 = int_to_ptr.vmem [resolvable:$true] %s349
          %355 = dma.hbm_to_vmem [thread:$0]  %s348, 256, %s350, %s338, 128, 128, 8
        $region48: #{tpu_custom_call.1} parent=39 // pred_fallthru
          _
      $region40: #{tpu_custom_call.1} parent=5 // pred_fallthru
        _
      %p356 = scmp.le.s32.totalorder 1, %s24
      %p357 = scmp.lt.s32.totalorder %s24, 3
      %p358 = pnand %p356, %p357
      %p359 = pneg %p358
      // Predicated region
      $region49: #{tpu_custom_call.1} parent=5 // pred_check
        _
      $region50: #{tpu_custom_call.1} parent=5 // pred_check_branch
        %361 = sbr.rel (%p358) target = $region52
      $region51: #{tpu_custom_call.1} parent=5 // pred_region
        %s362 = ssub.s32 %s24, 1
        %s363 = sand.u32 %s51, 1
        %s364 = scalar_lea.sflag [#allocation5], %s363
        %s365 = sand.u32 %s51, 1
        %s366 = smul.addr %s365, 8
        %s367 = scalar_lea.vmem [#allocation4], %s366
        // Predicated region
        $region53: #{tpu_custom_call.1} parent=51 // pred_check
          %p368 = pneg %p64
        $region54: #{tpu_custom_call.1} parent=51 // pred_check_branch
          %370 = sbr.rel (%p368) target = $region56
        $region55: #{tpu_custom_call.1} parent=51 // pred_region
          %372 = dma.done %s364, 128
        $region56: #{tpu_custom_call.1} parent=51 // pred_fallthru
          _
        %s373 = sand.u32 %s29, 1
        %s374 = scalar_lea.sflag [#allocation8], %s373
        %s375 = sand.u32 %s77, 1
        %s376 = smul.addr %s375, 16
        %s377 = scalar_lea.vmem [#allocation7], %s376
        // Predicated region
        $region57: #{tpu_custom_call.1} parent=51 // pred_check
          %p378 = pneg %p90
        $region58: #{tpu_custom_call.1} parent=51 // pred_check_branch
          %380 = sbr.rel (%p378) target = $region60
        $region59: #{tpu_custom_call.1} parent=51 // pred_region
          %382 = dma.done %s374, 256
        $region60: #{tpu_custom_call.1} parent=51 // pred_fallthru
          _
        // Predicated region
        $region61: #{tpu_custom_call.1} parent=51 // pred_check
          %p383 = pneg %p111
        $region62: #{tpu_custom_call.1} parent=51 // pred_check_branch
          %385 = sbr.rel (%p383) target = $region64
        $region63: #{tpu_custom_call.1} parent=51 // pred_region
          %387 = dma.done [#allocation8], 512
        $region64: #{tpu_custom_call.1} parent=51 // pred_fallthru
          _
        // Predicated region
        $region65: #{tpu_custom_call.1} parent=51 // pred_check
          %p388 = pneg %p153
        $region66: #{tpu_custom_call.1} parent=51 // pred_check_branch
          %390 = sbr.rel (%p388) target = $region68
        $region67: #{tpu_custom_call.1} parent=51 // pred_region
          %392 = dma.done [#allocation11], 512
        $region68: #{tpu_custom_call.1} parent=51 // pred_fallthru
          _
        // Predicated region
        $region69: #{tpu_custom_call.1} parent=51 // pred_check
          %p393 = pneg %p195
        $region70: #{tpu_custom_call.1} parent=51 // pred_check_branch
          %395 = sbr.rel (%p393) target = $region72
        $region71: #{tpu_custom_call.1} parent=51 // pred_region
          %397 = dma.done [#allocation11], 512
        $region72: #{tpu_custom_call.1} parent=51 // pred_fallthru
          _
        %s398 = sand.u32 %s51, 1
        %s399 = scalar_lea.sflag [#allocation5], %s398
        %s400 = sand.u32 %s51, 1
        %s401 = smul.addr %s400, 8
        %s402 = scalar_lea.vmem [#allocation4], %s401
        %p403 = pneg %p64
        %p404 = pneg %p61
        %s405 = sand.u32 %s29, 1
        %s406 = scalar_lea.sflag [#allocation8], %s405
        %s407 = sand.u32 %s77, 1
        %s408 = smul.addr %s407, 16
        %s409 = scalar_lea.vmem [#allocation7], %s408
        %p410 = pneg %p90
        %p411 = pneg %p87
        %p412 = pneg %p111
        %p413 = pneg %p108
        %p414 = pneg %p132
        %p415 = pneg %p129
        %p416 = pneg %p153
        %p417 = pneg %p150
        %p418 = pneg %p174
        %p419 = pneg %p171
        %p420 = pneg %p195
        %p421 = pneg %p192
        %p422 = pneg %p216
        %p423 = pneg %p213
        %p424 = pneg %p244
        %p425 = pneg %p241
        %s426 = sand.u32 %s231, 1
        %s427 = scalar_lea.sflag [#allocation6], %s426
        %s428 = sand.u32 %s231, 1
        %s429 = smul.addr %s428, 8
        %s430 = scalar_lea.vmem [#allocation13], %s429
        %p431 = scmp.eq.s32.totalorder %s34, 0
        // Predicated region
        $region73: #{tpu_custom_call.1} parent=51 // pred_check
          %p432 = pneg %p431
        $region74: #{tpu_custom_call.1} parent=51 // pred_check_branch
          %434 = sbr.rel (%p432) target = $region76
        $region75: #{tpu_custom_call.1} parent=51 // pred_region
          %v435 = vld [vmem:[%s377] sm:$0xff]
          %v436 = vld [vmem:[%s377 + $0x8] sm:$0xff]
          %v437 = vld [vmem:[#allocation10] sm:$0xff]
          %v438 = vld [vmem:[#allocation10 + $0x8] sm:$0xff]
          %v439 = vld [vmem:[#allocation10 + $0x10] sm:$0xff]
          %v440 = vld [vmem:[#allocation10 + $0x18] sm:$0xff]
          %v441 = vld [vmem:[%s5] sm:$0x1]
          %v443 = vperm.slane %v441, 0
          %vm445 = vcmask 261120
          %v447 = vsel %vm445, %v435, 0
          %v450 = vsel %vm445, %v436, 0
          %452 = vmatpush.msra.mxu0 0.0
          %453 = vmatpush.msra.mxu0 0.0
          %454 = vmatpush.msra.mxu0 0.0
          %455 = vmatpush.msra.mxu0 0.0
          %456 = vmatpush.msra.mxu0 0.0
          %457 = vmatpush.msra.mxu0 0.0
          %458 = vmatpush.msra.mxu0 0.0
          %459 = vmatpush.msra.mxu0 0.0
          %460 = vmatpush.msra.mxu0 0.0
          %461 = vmatpush.msra.mxu0 0.0
          %462 = vmatpush.msra.mxu0 0.0
          %463 = vmatpush.msra.mxu0 0.0
          %464 = vmatpush.msra.mxu0 %v440
          %465 = vmatpush.msra.mxu0 %v439
          %466 = vmatpush.msra.mxu0 %v438
          %467 = vmatpush.msra.mxu0 %v437
          %468 = vmatmul.f32.gmra.mxu0 %v447
          %v469 = vpop.f32.mrf.mxu0
          %v470 = vadd.f32 %v443, %v469
          %471 = vmatmul.f32.gmra.mxu0 %v450
          %v472 = vpop.f32.mrf.mxu0
          %v473 = vadd.f32 %v443, %v472
          %474 = vdwg.mxu0
          %vm475 = vcmask 523264
          %476 = vst.msk [vmem:[#allocation2] sm:$0xff] %vm475, %v470
          %477 = vst.msk [vmem:[#allocation2 + $0x8] sm:$0xff] %vm475, %v473
        $region76: #{tpu_custom_call.1} parent=51 // pred_fallthru
          _
        %v478 = vld [vmem:[%s367] sm:$0xff]
        %v479 = vld [vmem:[#allocation9] sm:$0xff]
        %v480 = vld [vmem:[#allocation9 + $0x8] sm:$0xff]
        %v481 = vld [vmem:[#allocation9 + $0x10] sm:$0xff]
        %v482 = vld [vmem:[#allocation9 + $0x18] sm:$0xff]
        %v483 = vld [vmem:[%s3] sm:$0x1]
        %v485 = vperm.slane %v483, 0
        %vm487 = vcmask 261120
        %v489 = vsel %vm487, %v478, 0
        %491 = vmatpush.msra.mxu0 0.0
        %492 = vmatpush.msra.mxu0 0.0
        %493 = vmatpush.msra.mxu0 0.0
        %494 = vmatpush.msra.mxu0 0.0
        %495 = vmatpush.msra.mxu0 0.0
        %496 = vmatpush.msra.mxu0 0.0
        %497 = vmatpush.msra.mxu0 0.0
        %498 = vmatpush.msra.mxu0 0.0
        %499 = vmatpush.msra.mxu0 0.0
        %500 = vmatpush.msra.mxu0 0.0
        %501 = vmatpush.msra.mxu0 0.0
        %502 = vmatpush.msra.mxu0 0.0
        %503 = vmatpush.msra.mxu0 %v482
        %504 = vmatpush.msra.mxu0 %v481
        %505 = vmatpush.msra.mxu0 %v480
        %506 = vmatpush.msra.mxu0 %v479
        %507 = vmatmul.f32.gmra.mxu0 %v489
        %v508 = vpop.f32.mrf.mxu0
        %v509 = vadd.f32 %v485, %v508
        %510 = vdwg.mxu0
        %v511 = vmul.f32 %v509, 0.35355338
        %v512 = vld [vmem:[#allocation2] sm:$0xff]
        %v513 = vld [vmem:[#allocation2 + $0x8] sm:$0xff]
        %vm514 = vcmask 64512
        %v516 = vsel %vm514, %v511, 0
        %v519 = vsel %vm514, %v512, 0
        %v522 = vsel %vm514, %v513, 0
        %524 = vmatpush.xpose.msra.mxu0 0.0
        %525 = vmatpush.xpose.msra.mxu0 0.0
        %526 = vmatpush.xpose.msra.mxu0 0.0
        %527 = vmatpush.xpose.msra.mxu0 0.0
        %528 = vmatpush.xpose.msra.mxu0 0.0
        %529 = vmatpush.xpose.msra.mxu0 0.0
        %530 = vmatpush.xpose.msra.mxu0 0.0
        %531 = vmatpush.xpose.msra.mxu0 0.0
        %532 = vmatpush.xpose.msra.mxu0 0.0
        %533 = vmatpush.xpose.msra.mxu0 0.0
        %534 = vmatpush.xpose.msra.mxu0 0.0
        %535 = vmatpush.xpose.msra.mxu0 0.0
        %536 = vmatpush.xpose.msra.mxu0 0.0
        %537 = vmatpush.xpose.msra.mxu0 0.0
        %538 = vmatpush.xpose.msra.mxu0 %v522
        %539 = vmatpush.xpose.msra.mxu0 %v519
        %540 = vmatmul.f32.gmra.mxu0 %v516
        %v541 = vpop.f32.mrf.mxu0
        %v542 = vadd.f32 0.0, %v541
        %543 = vdwg.mxu0
        %vm544 = vcmask 130048
        %v545 = vsel %vm544, %v542, -inf
        %546 = vmax.xlane.f32.xlu0 %v545
        %v547 = vpop.xlane.xlu0 %546
        %v548 = vsub.f32 %v542, %v547
        %v549 = vmul.f32 %v548, 1.442695
        %v550 = vpow.pop %v549
        %v551 = vsel %vm544, %v550, 0.0
        %552 = vadd.xlane.f32.xlu0 %v551
        %v553 = vpop.xlane.xlu0 %552
        %554 = vrot.lane.b32.xlu0 %v512, 96
        %v555 = vpop.permute.xlu0 %554
        %556 = vrot.lane.b32.xlu0 %v513, 96
        %v557 = vpop.permute.xlu0 %556
        %v561 = vsel %vm544, %v550, 0
        %563 = vmatpush.msra.mxu0 0.0
        %564 = vmatpush.msra.mxu0 0.0
        %565 = vmatpush.msra.mxu0 0.0
        %566 = vmatpush.msra.mxu0 0.0
        %567 = vmatpush.msra.mxu0 0.0
        %568 = vmatpush.msra.mxu0 0.0
        %569 = vmatpush.msra.mxu0 0.0
        %570 = vmatpush.msra.mxu0 0.0
        %571 = vmatpush.msra.mxu0 0.0
        %572 = vmatpush.msra.mxu0 0.0
        %573 = vmatpush.msra.mxu0 0.0
        %574 = vmatpush.msra.mxu0 0.0
        %575 = vmatpush.msra.mxu0 0.0
        %576 = vmatpush.msra.mxu0 0.0
        %577 = vmatpush.msra.mxu0 %v557
        %578 = vmatpush.msra.mxu0 %v555
        %579 = vmatmul.f32.gmra.mxu0 %v561
        %v580 = vpop.f32.mrf.mxu0
        %v581 = vadd.f32 0.0, %v580
        %582 = vdwg.mxu0
        %v583 = vrcp.pop %v553
        %v584 = vmul.f32 %v581, %v583
        %585 = vst.msk [vmem:[#allocation3] sm:$0xff] %vm514, %v584
        %v586 = vld [vmem:[#allocation2] sm:$0xff]
        %v587 = vld [vmem:[#allocation2 + $0x8] sm:$0xff]
        %588 = vrot.lane.b32.xlu0 %v511, 120
        %v589 = vpop.permute.xlu0 %588
        %592 = vrot.lane.b32.xlu0 %v586, 120
        %v593 = vpop.permute.xlu0 %592
        %594 = vrot.lane.b32.xlu0 %v587, 120
        %v595 = vpop.permute.xlu0 %594
        %v596 = vsel %vm514, %v589, 0
        %v598 = vsel %vm514, %v593, 0
        %v600 = vsel %vm514, %v595, 0
        %602 = vmatpush.xpose.msra.mxu0 0.0
        %603 = vmatpush.xpose.msra.mxu0 0.0
        %604 = vmatpush.xpose.msra.mxu0 0.0
        %605 = vmatpush.xpose.msra.mxu0 0.0
        %606 = vmatpush.xpose.msra.mxu0 0.0
        %607 = vmatpush.xpose.msra.mxu0 0.0
        %608 = vmatpush.xpose.msra.mxu0 0.0
        %609 = vmatpush.xpose.msra.mxu0 0.0
        %610 = vmatpush.xpose.msra.mxu0 0.0
        %611 = vmatpush.xpose.msra.mxu0 0.0
        %612 = vmatpush.xpose.msra.mxu0 0.0
        %613 = vmatpush.xpose.msra.mxu0 0.0
        %614 = vmatpush.xpose.msra.mxu0 0.0
        %615 = vmatpush.xpose.msra.mxu0 0.0
        %616 = vmatpush.xpose.msra.mxu0 %v600
        %617 = vmatpush.xpose.msra.mxu0 %v598
        %618 = vmatmul.f32.gmra.mxu0 %v596
        %v619 = vpop.f32.mrf.mxu0
        %v620 = vadd.f32 0.0, %v619
        %621 = vdwg.mxu0
        %v622 = vsel %vm544, %v620, -inf
        %623 = vmax.xlane.f32.xlu0 %v622
        %v624 = vpop.xlane.xlu0 %623
        %v625 = vsub.f32 %v620, %v624
        %v626 = vmul.f32 %v625, 1.442695
        %v627 = vpow.pop %v626
        %v628 = vsel %vm544, %v627, 0.0
        %629 = vadd.xlane.f32.xlu0 %v628
        %v630 = vpop.xlane.xlu0 %629
        %631 = vrot.lane.b32.xlu0 %v586, 88
        %v632 = vpop.permute.xlu0 %631
        %633 = vrot.lane.b32.xlu0 %v587, 88
        %v634 = vpop.permute.xlu0 %633
        %v638 = vsel %vm544, %v627, 0
        %640 = vmatpush.msra.mxu0 0.0
        %641 = vmatpush.msra.mxu0 0.0
        %642 = vmatpush.msra.mxu0 0.0
        %643 = vmatpush.msra.mxu0 0.0
        %644 = vmatpush.msra.mxu0 0.0
        %645 = vmatpush.msra.mxu0 0.0
        %646 = vmatpush.msra.mxu0 0.0
        %647 = vmatpush.msra.mxu0 0.0
        %648 = vmatpush.msra.mxu0 0.0
        %649 = vmatpush.msra.mxu0 0.0
        %650 = vmatpush.msra.mxu0 0.0
        %651 = vmatpush.msra.mxu0 0.0
        %652 = vmatpush.msra.mxu0 0.0
        %653 = vmatpush.msra.mxu0 0.0
        %654 = vmatpush.msra.mxu0 %v634
        %655 = vmatpush.msra.mxu0 %v632
        %656 = vmatmul.f32.gmra.mxu0 %v638
        %v657 = vpop.f32.mrf.mxu0
        %v658 = vadd.f32 0.0, %v657
        %659 = vdwg.mxu0
        %v660 = vrcp.pop %v630
        %v661 = vmul.f32 %v658, %v660
        %663 = vrot.lane.b32.xlu0 %v661, 8
        %v664 = vpop.permute.xlu0 %663
        %vm666 = vcmask 130112
        %667 = vst.msk [vmem:[#allocation3] sm:$0xff] %vm666, %v664
        %v668 = vld [vmem:[#allocation2] sm:$0xff]
        %v669 = vld [vmem:[#allocation2 + $0x8] sm:$0xff]
        %670 = vrot.lane.b32.xlu0 %v511, 112
        %v671 = vpop.permute.xlu0 %670
        %674 = vrot.lane.b32.xlu0 %v668, 112
        %v675 = vpop.permute.xlu0 %674
        %676 = vrot.lane.b32.xlu0 %v669, 112
        %v677 = vpop.permute.xlu0 %676
        %v678 = vsel %vm514, %v671, 0
        %v680 = vsel %vm514, %v675, 0
        %v682 = vsel %vm514, %v677, 0
        %684 = vmatpush.xpose.msra.mxu0 0.0
        %685 = vmatpush.xpose.msra.mxu0 0.0
        %686 = vmatpush.xpose.msra.mxu0 0.0
        %687 = vmatpush.xpose.msra.mxu0 0.0
        %688 = vmatpush.xpose.msra.mxu0 0.0
        %689 = vmatpush.xpose.msra.mxu0 0.0
        %690 = vmatpush.xpose.msra.mxu0 0.0
        %691 = vmatpush.xpose.msra.mxu0 0.0
        %692 = vmatpush.xpose.msra.mxu0 0.0
        %693 = vmatpush.xpose.msra.mxu0 0.0
        %694 = vmatpush.xpose.msra.mxu0 0.0
        %695 = vmatpush.xpose.msra.mxu0 0.0
        %696 = vmatpush.xpose.msra.mxu0 0.0
        %697 = vmatpush.xpose.msra.mxu0 0.0
        %698 = vmatpush.xpose.msra.mxu0 %v682
        %699 = vmatpush.xpose.msra.mxu0 %v680
        %700 = vmatmul.f32.gmra.mxu0 %v678
        %v701 = vpop.f32.mrf.mxu0
        %v702 = vadd.f32 0.0, %v701
        %703 = vdwg.mxu0
        %v704 = vsel %vm544, %v702, -inf
        %705 = vmax.xlane.f32.xlu0 %v704
        %v706 = vpop.xlane.xlu0 %705
        %v707 = vsub.f32 %v702, %v706
        %v708 = vmul.f32 %v707, 1.442695
        %v709 = vpow.pop %v708
        %v710 = vsel %vm544, %v709, 0.0
        %711 = vadd.xlane.f32.xlu0 %v710
        %v712 = vpop.xlane.xlu0 %711
        %713 = vrot.lane.b32.xlu0 %v668, 80
        %v714 = vpop.permute.xlu0 %713
        %715 = vrot.lane.b32.xlu0 %v669, 80
        %v716 = vpop.permute.xlu0 %715
        %v720 = vsel %vm544, %v709, 0
        %722 = vmatpush.msra.mxu0 0.0
        %723 = vmatpush.msra.mxu0 0.0
        %724 = vmatpush.msra.mxu0 0.0
        %725 = vmatpush.msra.mxu0 0.0
        %726 = vmatpush.msra.mxu0 0.0
        %727 = vmatpush.msra.mxu0 0.0
        %728 = vmatpush.msra.mxu0 0.0
        %729 = vmatpush.msra.mxu0 0.0
        %730 = vmatpush.msra.mxu0 0.0
        %731 = vmatpush.msra.mxu0 0.0
        %732 = vmatpush.msra.mxu0 0.0
        %733 = vmatpush.msra.mxu0 0.0
        %734 = vmatpush.msra.mxu0 0.0
        %735 = vmatpush.msra.mxu0 0.0
        %736 = vmatpush.msra.mxu0 %v716
        %737 = vmatpush.msra.mxu0 %v714
        %738 = vmatmul.f32.gmra.mxu0 %v720
        %v739 = vpop.f32.mrf.mxu0
        %v740 = vadd.f32 0.0, %v739
        %741 = vdwg.mxu0
        %v742 = vrcp.pop %v712
        %v743 = vmul.f32 %v740, %v742
        %745 = vrot.lane.b32.xlu0 %v743, 16
        %v746 = vpop.permute.xlu0 %745
        %vm748 = vcmask 195712
        %749 = vst.msk [vmem:[#allocation3] sm:$0xff] %vm748, %v746
        %v750 = vld [vmem:[#allocation2] sm:$0xff]
        %v751 = vld [vmem:[#allocation2 + $0x8] sm:$0xff]
        %752 = vrot.lane.b32.xlu0 %v511, 104
        %v753 = vpop.permute.xlu0 %752
        %756 = vrot.lane.b32.xlu0 %v750, 104
        %v757 = vpop.permute.xlu0 %756
        %758 = vrot.lane.b32.xlu0 %v751, 104
        %v759 = vpop.permute.xlu0 %758
        %v760 = vsel %vm514, %v753, 0
        %v762 = vsel %vm514, %v757, 0
        %v764 = vsel %vm514, %v759, 0
        %766 = vmatpush.xpose.msra.mxu0 0.0
        %767 = vmatpush.xpose.msra.mxu0 0.0
        %768 = vmatpush.xpose.msra.mxu0 0.0
        %769 = vmatpush.xpose.msra.mxu0 0.0
        %770 = vmatpush.xpose.msra.mxu0 0.0
        %771 = vmatpush.xpose.msra.mxu0 0.0
        %772 = vmatpush.xpose.msra.mxu0 0.0
        %773 = vmatpush.xpose.msra.mxu0 0.0
        %774 = vmatpush.xpose.msra.mxu0 0.0
        %775 = vmatpush.xpose.msra.mxu0 0.0
        %776 = vmatpush.xpose.msra.mxu0 0.0
        %777 = vmatpush.xpose.msra.mxu0 0.0
        %778 = vmatpush.xpose.msra.mxu0 0.0
        %779 = vmatpush.xpose.msra.mxu0 0.0
        %780 = vmatpush.xpose.msra.mxu0 %v764
        %781 = vmatpush.xpose.msra.mxu0 %v762
        %782 = vmatmul.f32.gmra.mxu0 %v760
        %v783 = vpop.f32.mrf.mxu0
        %v784 = vadd.f32 0.0, %v783
        %785 = vdwg.mxu0
        %v786 = vsel %vm544, %v784, -inf
        %787 = vmax.xlane.f32.xlu0 %v786
        %v788 = vpop.xlane.xlu0 %787
        %v789 = vsub.f32 %v784, %v788
        %v790 = vmul.f32 %v789, 1.442695
        %v791 = vpow.pop %v790
        %v792 = vsel %vm544, %v791, 0.0
        %793 = vadd.xlane.f32.xlu0 %v792
        %v794 = vpop.xlane.xlu0 %793
        %795 = vrot.lane.b32.xlu0 %v750, 72
        %v796 = vpop.permute.xlu0 %795
        %797 = vrot.lane.b32.xlu0 %v751, 72
        %v798 = vpop.permute.xlu0 %797
        %v802 = vsel %vm544, %v791, 0
        %804 = vmatpush.msra.mxu0 0.0
        %805 = vmatpush.msra.mxu0 0.0
        %806 = vmatpush.msra.mxu0 0.0
        %807 = vmatpush.msra.mxu0 0.0
        %808 = vmatpush.msra.mxu0 0.0
        %809 = vmatpush.msra.mxu0 0.0
        %810 = vmatpush.msra.mxu0 0.0
        %811 = vmatpush.msra.mxu0 0.0
        %812 = vmatpush.msra.mxu0 0.0
        %813 = vmatpush.msra.mxu0 0.0
        %814 = vmatpush.msra.mxu0 0.0
        %815 = vmatpush.msra.mxu0 0.0
        %816 = vmatpush.msra.mxu0 0.0
        %817 = vmatpush.msra.mxu0 0.0
        %818 = vmatpush.msra.mxu0 %v798
        %819 = vmatpush.msra.mxu0 %v796
        %820 = vmatmul.f32.gmra.mxu0 %v802
        %v821 = vpop.f32.mrf.mxu0
        %v822 = vadd.f32 0.0, %v821
        %823 = vdwg.mxu0
        %v824 = vrcp.pop %v794
        %v825 = vmul.f32 %v822, %v824
        %827 = vrot.lane.b32.xlu0 %v825, 24
        %v828 = vpop.permute.xlu0 %827
        %vm830 = vcmask 261312
        %831 = vst.msk [vmem:[#allocation3] sm:$0xff] %vm830, %v828
        %v832 = vld [vmem:[#allocation3] sm:$0xff]
        %v833 = vld [vmem:[#allocation12] sm:$0xff]
        %v834 = vld [vmem:[#allocation12 + $0x8] sm:$0xff]
        %v835 = vld [vmem:[#allocation12 + $0x10] sm:$0xff]
        %v836 = vld [vmem:[#allocation12 + $0x18] sm:$0xff]
        %v837 = vld [vmem:[%s7] sm:$0x1]
        %v839 = vperm.slane %v837, 0
        %v842 = vsel %vm487, %v832, 0
        %844 = vmatpush.msra.mxu0 0.0
        %845 = vmatpush.msra.mxu0 0.0
        %846 = vmatpush.msra.mxu0 0.0
        %847 = vmatpush.msra.mxu0 0.0
        %848 = vmatpush.msra.mxu0 0.0
        %849 = vmatpush.msra.mxu0 0.0
        %850 = vmatpush.msra.mxu0 0.0
        %851 = vmatpush.msra.mxu0 0.0
        %852 = vmatpush.msra.mxu0 0.0
        %853 = vmatpush.msra.mxu0 0.0
        %854 = vmatpush.msra.mxu0 0.0
        %855 = vmatpush.msra.mxu0 0.0
        %856 = vmatpush.msra.mxu0 %v836
        %857 = vmatpush.msra.mxu0 %v835
        %858 = vmatpush.msra.mxu0 %v834
        %859 = vmatpush.msra.mxu0 %v833
        %860 = vmatmul.f32.gmra.mxu0 %v842
        %v861 = vpop.f32.mrf.mxu0
        %v862 = vadd.f32 %v839, %v861
        %863 = vdwg.mxu0
        %864 = vst.msk [vmem:[%s430] sm:$0xff] %vm487, %v862
        %s865 = sand.u32 %s231, 1
        %s866 = scalar_lea.sflag [#allocation6], %s865
        %s867 = sand.u32 %s231, 1
        %s868 = smul.addr %s867, 8
        %s869 = scalar_lea.vmem [#allocation13], %s868
        // Predicated region
        $region77: #{tpu_custom_call.1} parent=51 // pred_check
          %p870 = pneg %p241
        $region78: #{tpu_custom_call.1} parent=51 // pred_check_branch
          %872 = sbr.rel (%p870) target = $region80
        $region79: #{tpu_custom_call.1} parent=51 // pred_region
          %874 = vsyncadd %s866, 0
          %s875 = sadd.s32 %s34, %s33
          %s876 = smul.addr %s875, 8
          %s877 = scalar_lea.hbm %s8, %s876
          %s879 = sshll.u32 %s869, 4
          %s880 = int_to_ptr.vmem [resolvable:$true] %s879
          %s881 = sshll.u32 %s877, 4
          %s882 = int_to_ptr.hbm [resolvable:$true] %s881
          %884 = dma.vmem_to_hbm [thread:$0]  %s880, 128, %s882, %s866
        $region80: #{tpu_custom_call.1} parent=51 // pred_fallthru
          _
      $region52: #{tpu_custom_call.1} parent=5 // pred_fallthru
        _
      %p885 = scmp.le.s32.totalorder 2, %s24
      // Predicated region
      $region81: #{tpu_custom_call.1} parent=5 // pred_check
        %p886 = pneg %p885
      $region82: #{tpu_custom_call.1} parent=5 // pred_check_branch
        %888 = sbr.rel (%p886) target = $region84
      $region83: #{tpu_custom_call.1} parent=5 // pred_region
        %s889 = ssub.s32 %s24, 2
        // Predicated region
        $region85: #{tpu_custom_call.1} parent=83 // pred_check
          %p890 = pneg %p247
        $region86: #{tpu_custom_call.1} parent=83 // pred_check_branch
          %892 = sbr.rel (%p890) target = $region88
        $region87: #{tpu_custom_call.1} parent=83 // pred_region
          %s893 = sand.u32 %s232, 1
          %s894 = scalar_lea.sflag [#allocation6], %s893
          %s895 = sand.u32 %s232, 1
          %s896 = smul.addr %s895, 8
          %s897 = scalar_lea.vmem [#allocation13], %s896
          %899 = dma.done %s894, 128
        $region88: #{tpu_custom_call.1} parent=83 // pred_fallthru
          _
      $region84: #{tpu_custom_call.1} parent=5 // pred_fallthru
        _
    $region6: #{tpu_custom_call.1} parent=1 // loop_footer
      %s28 = sadd.s32 1, %s24
    $region7: #{tpu_custom_call.1} parent=1 // loop_footer_branch
      %23 = sbr.rel target = $region3
    $region8: #{tpu_custom_call.1} parent=1 // loop_exit
      _
    %900 = vsyncpa [#allocation5], 1
    %s901 = scalar_lea.sflag [#allocation5], 1
    %902 = vsyncpa %s901, 1
    %903 = vsyncpa [#allocation8], 1
    %s904 = scalar_lea.sflag [#allocation8], 1
    %905 = vsyncpa %s904, 1
    %906 = vsyncpa [#allocation11], 1
    %907 = vsyncpa [#allocation6], 1
    %s908 = scalar_lea.sflag [#allocation6], 1
    %909 = vsyncpa %s908, 1

</llo_original>
